<compile_context>
chip_gen: v7x
topology: tpu7x:2x2x1
jax: 0.10.0
libtpu: 0.0.40
codegen_flags: <defaults>
</compile_context>

<pallas_src>
import functools

import jax
import jax.numpy as jnp
from jax.experimental import pallas as pl
from jax.experimental.pallas import tpu as pltpu

LN_EPS = 1e-5


def _layernorm(x, gamma, beta):
    # x: (P, C), normalize over the channel (lane) axis.
    mean = jnp.mean(x, axis=-1, keepdims=True)
    var = jnp.mean(jnp.square(x - mean), axis=-1, keepdims=True)
    return (x - mean) * jax.lax.rsqrt(var + LN_EPS) * gamma + beta


def _gelu_exact(x):
    # torch.nn.GELU() default = exact erf formulation (kept for semantic
    # fidelity; a tanh/EUP approximation is a drop-in if tolerance permits).
    return 0.5 * x * (1.0 + jax.lax.erf(x * 0.7071067811865476))


def mixer_layer_kernel(
    x_ref,                      # (1, P, C)  f32 block (pipelined over batch)
    g1_ref, be1_ref,            # (1, C)     f32 LayerNorm 1
    w1t_ref, b1t_ref,           # (Ht, P) bf16,  (Ht, 1) f32   token fc1
    w2t_ref, b2t_ref,           # (P, Ht) bf16,  (P, 1)  f32   token fc2
    g2_ref, be2_ref,            # (1, C)     f32 LayerNorm 2
    w1c_ref, b1c_ref,           # (C, Hc) bf16,  (1, Hc) f32   channel fc1 (pre-T)
    w2c_ref, b2c_ref,           # (Hc, C) bf16,  (1, C)  f32   channel fc2 (pre-T)
    o_ref,                      # (1, P, C)
):
    x = x_ref[0]  # (P, C) f32

    # ---------------- Token mixer (left-multiplies, no transposes) ----------
    y = _layernorm(x, g1_ref[0], be1_ref[0])                     # (P, C) f32
    yb = y.astype(jnp.bfloat16)
    h = jnp.dot(w1t_ref[...], yb,
                preferred_element_type=jnp.float32) + b1t_ref[...]   # (Ht, C)
    h = _gelu_exact(h)
    z = jnp.dot(w2t_ref[...], h.astype(jnp.bfloat16),
                preferred_element_type=jnp.float32) + b2t_ref[...]   # (P, C)
    x = x + z                                                    # residual

    # ---------------- Channel mixer (weights pre-transposed) ----------------
    y = _layernorm(x, g2_ref[0], be2_ref[0])                     # (P, C) f32
    yb = y.astype(jnp.bfloat16)
    h = jnp.dot(yb, w1c_ref[...],
                preferred_element_type=jnp.float32) + b1c_ref[0]     # (P, Hc)
    h = _gelu_exact(h)
    z = jnp.dot(h.astype(jnp.bfloat16), w2c_ref[...],
                preferred_element_type=jnp.float32) + b2c_ref[0]     # (P, C)

    o_ref[0] = (x + z).astype(o_ref.dtype)


def _prepare_kernel_params(p):
    """One-time wrapper-side layout prep: reshape LN/bias vectors, pre-transpose
    the channel-mixer weights and cast all matmul weights to bf16 (halves the
    weight HBM traffic and VMEM footprint; the MXU is bf16-native)."""
    bf16 = jnp.bfloat16
    return dict(
        g1=p["ln1_g"].reshape(1, -1), be1=p["ln1_b"].reshape(1, -1),
        w1t=p["tok_w1"].astype(bf16),          # (Ht, P)  used as LEFT operand
        b1t=p["tok_b1"].reshape(-1, 1),        # (Ht, 1)  column broadcast
        w2t=p["tok_w2"].astype(bf16),          # (P, Ht)  used as LEFT operand
        b2t=p["tok_b2"].reshape(-1, 1),        # (P, 1)
        g2=p["ln2_g"].reshape(1, -1), be2=p["ln2_b"].reshape(1, -1),
        w1c=p["ch_w1"].T.astype(bf16),         # (C, Hc)  pre-transposed
        b1c=p["ch_b1"].reshape(1, -1),         # (1, Hc)
        w2c=p["ch_w2"].T.astype(bf16),         # (Hc, C)  pre-transposed
        b2c=p["ch_b2"].reshape(1, -1),         # (1, C)
    )


def mixer_layer(x, params):
    """x: (B, P, C) f32; params: PyTorch-layout f32 weights (see init_params)."""
    B, P, C = x.shape
    kp = _prepare_kernel_params(params)
    Ht = kp["w1t"].shape[0]
    Hc = kp["w1c"].shape[1]

    # Constant parameters live whole-array in VMEM: copied in once, not
    # double-buffered by the batch pipeline (halves weight VMEM residency).
    resident = pl.BlockSpec(memory_space=pltpu.MemorySpace.VMEM)

    in_specs = [pl.BlockSpec((1, P, C), lambda b: (b, 0, 0))] + [resident] * 12
    out_specs = pl.BlockSpec((1, P, C), lambda b: (b, 0, 0))

    # VMEM budget: bf16 weights (single-buffered) + f32 vectors + pipelined
    # x/o blocks (double-buffered) + f32 intermediates, with 2x headroom,
    # clamped to stay inside v7x's 64 MiB physical VMEM.
    est = (2 * (2 * Ht * P + 2 * C * Hc)               # bf16 weights
           + 4 * (4 * C + Ht + P + Hc)                 # LN params + biases (f32)
           + 2 * 2 * P * C * x.dtype.itemsize          # double-buffered x and o
           + 4 * (Ht * C + P * Hc + 8 * P * C))        # f32 intermediates
    vmem_limit = int(min(max(2 * est, 16 * 2**20), 56 * 2**20))

    return pl.pallas_call(
        mixer_layer_kernel,
        out_shape=jax.ShapeDtypeStruct((B, P, C), x.dtype),
        grid=(B,),
        in_specs=in_specs,
        out_specs=out_specs,
        compiler_params=pltpu.CompilerParams(
            dimension_semantics=("parallel",),
            vmem_limit_bytes=vmem_limit,
        ),
    )(
        x,
        kp["g1"], kp["be1"],
        kp["w1t"], kp["b1t"], kp["w2t"], kp["b2t"],
        kp["g2"], kp["be2"],
        kp["w1c"], kp["b1c"], kp["w2c"], kp["b2c"],
    )


def init_params(key, num_patches, num_channels, expansion_token, expansion_channel):
    """Parameters in PyTorch nn.Linear layout, f32."""
    Ht = int(expansion_token * num_patches)
    Hc = int(expansion_channel * num_channels)
    ks = jax.random.split(key, 8)
    scale = 0.02

    def w(k, shape):
        return (scale * jax.random.normal(k, shape)).astype(jnp.float32)

    return {
        "ln1_g": jnp.ones((num_channels,), jnp.float32),
        "ln1_b": jnp.zeros((num_channels,), jnp.float32),
        "tok_w1": w(ks[0], (Ht, num_patches)),
        "tok_b1": w(ks[1], (Ht,)),
        "tok_w2": w(ks[2], (num_patches, Ht)),
        "tok_b2": w(ks[3], (num_patches,)),
        "ln2_g": jnp.ones((num_channels,), jnp.float32),
        "ln2_b": jnp.zeros((num_channels,), jnp.float32),
        "ch_w1": w(ks[4], (Hc, num_channels)),
        "ch_b1": w(ks[5], (Hc,)),
        "ch_w2": w(ks[6], (num_channels, Hc)),
        "ch_b2": w(ks[7], (num_channels,)),
    }


def mixer_layer_ref(x, p):
    """Pure-JAX f32 reference mirroring the PyTorch forward exactly."""
    def ln(v, g, b):
        m = jnp.mean(v, axis=-1, keepdims=True)
        s = jnp.mean(jnp.square(v - m), axis=-1, keepdims=True)
        return (v - m) * jax.lax.rsqrt(s + LN_EPS) * g + b

    gelu = functools.partial(jax.nn.gelu, approximate=False)

    # token mixer
    y = ln(x, p["ln1_g"], p["ln1_b"])
    yt = jnp.swapaxes(y, 1, 2)                      # (B, C, P)
    h = gelu(yt @ p["tok_w1"].T + p["tok_b1"])
    z = h @ p["tok_w2"].T + p["tok_b2"]
    x = x + jnp.swapaxes(z, 1, 2)
    # channel mixer
    y = ln(x, p["ln2_g"], p["ln2_b"])
    h = gelu(y @ p["ch_w1"].T + p["ch_b1"])
    z = h @ p["ch_w2"].T + p["ch_b2"]
    return x + z


if __name__ == "__main__":
    # Small, TPU-friendly demo shapes: (batch, num_patches, num_channels).
    B, P, C = 2, 16, 128
    expansion_token, expansion_channel = 2, 2

    key = jax.random.PRNGKey(0)
    kx, kp = jax.random.split(key)
    x = jax.random.normal(kx, (B, P, C), dtype=jnp.float32)
    params = init_params(kp, P, C, expansion_token, expansion_channel)

    out = jax.block_until_ready(mixer_layer(x, params))
    ref = mixer_layer_ref(x, params)

    assert out.shape == (B, P, C)
    # bf16 MXU inputs with f32 accumulation -> relaxed tolerance vs f32 reference.
    max_err = float(jnp.max(jnp.abs(out - ref)))
    assert jnp.allclose(out, ref, atol=2e-2, rtol=2e-2), max_err

    print("KERNEL_OK")
</pallas_src>

<mosaic_0001>
module attributes {stable_mosaic.version = 11 : i64} {
  func.func @mixer_layer_kernel(%arg0: i32, %arg1: memref<1x16x128xf32, #tpu.memory_space<vmem>>, %arg2: memref<1x128xf32, #tpu.memory_space<vmem>>, %arg3: memref<1x128xf32, #tpu.memory_space<vmem>>, %arg4: memref<32x16xbf16, #tpu.memory_space<vmem>>, %arg5: memref<32x1xf32, #tpu.memory_space<vmem>>, %arg6: memref<16x32xbf16, #tpu.memory_space<vmem>>, %arg7: memref<16x1xf32, #tpu.memory_space<vmem>>, %arg8: memref<1x128xf32, #tpu.memory_space<vmem>>, %arg9: memref<1x128xf32, #tpu.memory_space<vmem>>, %arg10: memref<128x256xbf16, #tpu.memory_space<vmem>>, %arg11: memref<1x256xf32, #tpu.memory_space<vmem>>, %arg12: memref<256x128xbf16, #tpu.memory_space<vmem>>, %arg13: memref<1x128xf32, #tpu.memory_space<vmem>>, %arg14: memref<1x16x128xf32, #tpu.memory_space<vmem>>) attributes {dimension_semantics = [#tpu.dimension_semantics<parallel>], iteration_bounds = array<i64: 2>, scalar_prefetch = 0 : i64, scratch_operands = 0 : i64, tpu.core_type = #tpu.core_type<tc>, window_params = [{transform_indices = @transform_0, window_bounds = array<i64: 1, 16, 128>}, {pipeline_mode = #tpu.pipeline_mode<synchronous>, transform_indices = @transform_1, window_bounds = array<i64: 1, 128>}, {pipeline_mode = #tpu.pipeline_mode<synchronous>, transform_indices = @transform_2, window_bounds = array<i64: 1, 128>}, {pipeline_mode = #tpu.pipeline_mode<synchronous>, transform_indices = @transform_3, window_bounds = array<i64: 32, 16>}, {pipeline_mode = #tpu.pipeline_mode<synchronous>, transform_indices = @transform_4, window_bounds = array<i64: 32, 1>}, {pipeline_mode = #tpu.pipeline_mode<synchronous>, transform_indices = @transform_5, window_bounds = array<i64: 16, 32>}, {pipeline_mode = #tpu.pipeline_mode<synchronous>, transform_indices = @transform_6, window_bounds = array<i64: 16, 1>}, {pipeline_mode = #tpu.pipeline_mode<synchronous>, transform_indices = @transform_7, window_bounds = array<i64: 1, 128>}, {pipeline_mode = #tpu.pipeline_mode<synchronous>, transform_indices = @transform_8, window_bounds = array<i64: 1, 128>}, {pipeline_mode = #tpu.pipeline_mode<synchronous>, transform_indices = @transform_9, window_bounds = array<i64: 128, 256>}, {pipeline_mode = #tpu.pipeline_mode<synchronous>, transform_indices = @transform_10, window_bounds = array<i64: 1, 256>}, {pipeline_mode = #tpu.pipeline_mode<synchronous>, transform_indices = @transform_11, window_bounds = array<i64: 256, 128>}, {pipeline_mode = #tpu.pipeline_mode<synchronous>, transform_indices = @transform_12, window_bounds = array<i64: 1, 128>}, {transform_indices = @transform_13, window_bounds = array<i64: 1, 16, 128>}]} {
    %c0 = arith.constant 0 : index
    %c0_0 = arith.constant 0 : index
    %c0_1 = arith.constant 0 : index
    %0 = vector.load %arg1[%c0, %c0_0, %c0_1] : memref<1x16x128xf32, #tpu.memory_space<vmem>>, vector<1x16x128xf32>
    %1 = vector.shape_cast %0 : vector<1x16x128xf32> to vector<16x128xf32>
    %c0_2 = arith.constant 0 : index
    %c0_3 = arith.constant 0 : index
    %2 = vector.load %arg2[%c0_2, %c0_3] : memref<1x128xf32, #tpu.memory_space<vmem>>, vector<1x128xf32>
    %3 = vector.shape_cast %2 : vector<1x128xf32> to vector<128xf32>
    %c0_4 = arith.constant 0 : index
    %c0_5 = arith.constant 0 : index
    %4 = vector.load %arg3[%c0_4, %c0_5] : memref<1x128xf32, #tpu.memory_space<vmem>>, vector<1x128xf32>
    %5 = vector.shape_cast %4 : vector<1x128xf32> to vector<128xf32>
    %cst = arith.constant dense<0.000000e+00> : vector<16xf32>
    %6 = vector.multi_reduction <add>, %1, %cst [1] : vector<16x128xf32> to vector<16xf32>
    %7 = vector.shape_cast %6 : vector<16xf32> to vector<16x1xf32>
    %cst_6 = arith.constant 1.280000e+02 : f32
    %8 = vector.broadcast %cst_6 : f32 to vector<16x1xf32>
    %9 = arith.divf %7, %8 : vector<16x1xf32>
    %10 = vector.broadcast %9 : vector<16x1xf32> to vector<16x128xf32>
    %11 = arith.subf %1, %10 : vector<16x128xf32>
    %12 = arith.mulf %11, %11 : vector<16x128xf32>
    %cst_7 = arith.constant dense<0.000000e+00> : vector<16xf32>
    %13 = vector.multi_reduction <add>, %12, %cst_7 [1] : vector<16x128xf32> to vector<16xf32>
    %14 = vector.shape_cast %13 : vector<16xf32> to vector<16x1xf32>
    %cst_8 = arith.constant 1.280000e+02 : f32
    %15 = vector.broadcast %cst_8 : f32 to vector<16x1xf32>
    %16 = arith.divf %14, %15 : vector<16x1xf32>
    %17 = vector.broadcast %9 : vector<16x1xf32> to vector<16x128xf32>
    %18 = arith.subf %1, %17 : vector<16x128xf32>
    %cst_9 = arith.constant 9.99999974E-6 : f32
    %19 = vector.broadcast %cst_9 : f32 to vector<16x1xf32>
    %20 = arith.addf %16, %19 : vector<16x1xf32>
    %21 = math.rsqrt %20 : vector<16x1xf32>
    %22 = vector.broadcast %21 : vector<16x1xf32> to vector<16x128xf32>
    %23 = arith.mulf %18, %22 : vector<16x128xf32>
    %24 = vector.shape_cast %3 : vector<128xf32> to vector<1x128xf32>
    %25 = vector.broadcast %24 : vector<1x128xf32> to vector<16x128xf32>
    %26 = arith.mulf %23, %25 : vector<16x128xf32>
    %27 = vector.shape_cast %5 : vector<128xf32> to vector<1x128xf32>
    %28 = vector.broadcast %27 : vector<1x128xf32> to vector<16x128xf32>
    %29 = arith.addf %26, %28 : vector<16x128xf32>
    %30 = arith.truncf %29 : vector<16x128xf32> to vector<16x128xbf16>
    %c0_10 = arith.constant 0 : index
    %c0_11 = arith.constant 0 : index
    %31 = vector.load %arg4[%c0_10, %c0_11] : memref<32x16xbf16, #tpu.memory_space<vmem>>, vector<32x16xbf16>
    %cst_12 = arith.constant dense<0.000000e+00> : vector<32x128xf32>
    %32 = tpu.matmul %31, %30, %cst_12 {dimension_numbers = #tpu.dot_dimension_numbers<[1], [0], [0], [1], [0, 0, 1, 1], [], []>} : vector<32x16xbf16>, vector<16x128xbf16>, vector<32x128xf32> -> vector<32x128xf32>
    %c0_13 = arith.constant 0 : index
    %c0_14 = arith.constant 0 : index
    %33 = vector.load %arg5[%c0_13, %c0_14] : memref<32x1xf32, #tpu.memory_space<vmem>>, vector<32x1xf32>
    %34 = vector.broadcast %33 : vector<32x1xf32> to vector<32x128xf32>
    %35 = arith.addf %32, %34 : vector<32x128xf32>
    %cst_15 = arith.constant 5.000000e-01 : f32
    %36 = vector.broadcast %cst_15 : f32 to vector<32x128xf32>
    %37 = arith.mulf %36, %35 : vector<32x128xf32>
    %cst_16 = arith.constant 0.707106769 : f32
    %38 = vector.broadcast %cst_16 : f32 to vector<32x128xf32>
    %39 = arith.mulf %35, %38 : vector<32x128xf32>
    %40 = math.erf %39 : vector<32x128xf32>
    %cst_17 = arith.constant 1.000000e+00 : f32
    %41 = vector.broadcast %cst_17 : f32 to vector<32x128xf32>
    %42 = arith.addf %41, %40 : vector<32x128xf32>
    %43 = arith.mulf %37, %42 : vector<32x128xf32>
    %c0_18 = arith.constant 0 : index
    %c0_19 = arith.constant 0 : index
    %44 = vector.load %arg6[%c0_18, %c0_19] : memref<16x32xbf16, #tpu.memory_space<vmem>>, vector<16x32xbf16>
    %45 = arith.truncf %43 : vector<32x128xf32> to vector<32x128xbf16>
    %cst_20 = arith.constant dense<0.000000e+00> : vector<16x128xf32>
    %46 = tpu.matmul %44, %45, %cst_20 {dimension_numbers = #tpu.dot_dimension_numbers<[1], [0], [0], [1], [0, 0, 1, 1], [], []>} : vector<16x32xbf16>, vector<32x128xbf16>, vector<16x128xf32> -> vector<16x128xf32>
    %c0_21 = arith.constant 0 : index
    %c0_22 = arith.constant 0 : index
    %47 = vector.load %arg7[%c0_21, %c0_22] : memref<16x1xf32, #tpu.memory_space<vmem>>, vector<16x1xf32>
    %48 = vector.broadcast %47 : vector<16x1xf32> to vector<16x128xf32>
    %49 = arith.addf %46, %48 : vector<16x128xf32>
    %50 = arith.addf %1, %49 : vector<16x128xf32>
    %c0_23 = arith.constant 0 : index
    %c0_24 = arith.constant 0 : index
    %51 = vector.load %arg8[%c0_23, %c0_24] : memref<1x128xf32, #tpu.memory_space<vmem>>, vector<1x128xf32>
    %52 = vector.shape_cast %51 : vector<1x128xf32> to vector<128xf32>
    %c0_25 = arith.constant 0 : index
    %c0_26 = arith.constant 0 : index
    %53 = vector.load %arg9[%c0_25, %c0_26] : memref<1x128xf32, #tpu.memory_space<vmem>>, vector<1x128xf32>
    %54 = vector.shape_cast %53 : vector<1x128xf32> to vector<128xf32>
    %cst_27 = arith.constant dense<0.000000e+00> : vector<16xf32>
    %55 = vector.multi_reduction <add>, %50, %cst_27 [1] : vector<16x128xf32> to vector<16xf32>
    %56 = vector.shape_cast %55 : vector<16xf32> to vector<16x1xf32>
    %cst_28 = arith.constant 1.280000e+02 : f32
    %57 = vector.broadcast %cst_28 : f32 to vector<16x1xf32>
    %58 = arith.divf %56, %57 : vector<16x1xf32>
    %59 = vector.broadcast %58 : vector<16x1xf32> to vector<16x128xf32>
    %60 = arith.subf %50, %59 : vector<16x128xf32>
    %61 = arith.mulf %60, %60 : vector<16x128xf32>
    %cst_29 = arith.constant dense<0.000000e+00> : vector<16xf32>
    %62 = vector.multi_reduction <add>, %61, %cst_29 [1] : vector<16x128xf32> to vector<16xf32>
    %63 = vector.shape_cast %62 : vector<16xf32> to vector<16x1xf32>
    %cst_30 = arith.constant 1.280000e+02 : f32
    %64 = vector.broadcast %cst_30 : f32 to vector<16x1xf32>
    %65 = arith.divf %63, %64 : vector<16x1xf32>
    %66 = vector.broadcast %58 : vector<16x1xf32> to vector<16x128xf32>
    %67 = arith.subf %50, %66 : vector<16x128xf32>
    %cst_31 = arith.constant 9.99999974E-6 : f32
    %68 = vector.broadcast %cst_31 : f32 to vector<16x1xf32>
    %69 = arith.addf %65, %68 : vector<16x1xf32>
    %70 = math.rsqrt %69 : vector<16x1xf32>
    %71 = vector.broadcast %70 : vector<16x1xf32> to vector<16x128xf32>
    %72 = arith.mulf %67, %71 : vector<16x128xf32>
    %73 = vector.shape_cast %52 : vector<128xf32> to vector<1x128xf32>
    %74 = vector.broadcast %73 : vector<1x128xf32> to vector<16x128xf32>
    %75 = arith.mulf %72, %74 : vector<16x128xf32>
    %76 = vector.shape_cast %54 : vector<128xf32> to vector<1x128xf32>
    %77 = vector.broadcast %76 : vector<1x128xf32> to vector<16x128xf32>
    %78 = arith.addf %75, %77 : vector<16x128xf32>
    %79 = arith.truncf %78 : vector<16x128xf32> to vector<16x128xbf16>
    %c0_32 = arith.constant 0 : index
    %c0_33 = arith.constant 0 : index
    %80 = vector.load %arg10[%c0_32, %c0_33] : memref<128x256xbf16, #tpu.memory_space<vmem>>, vector<128x256xbf16>
    %cst_34 = arith.constant dense<0.000000e+00> : vector<16x256xf32>
    %81 = tpu.matmul %79, %80, %cst_34 {dimension_numbers = #tpu.dot_dimension_numbers<[1], [0], [0], [1], [0, 0, 1, 1], [], []>} : vector<16x128xbf16>, vector<128x256xbf16>, vector<16x256xf32> -> vector<16x256xf32>
    %c0_35 = arith.constant 0 : index
    %c0_36 = arith.constant 0 : index
    %82 = vector.load %arg11[%c0_35, %c0_36] : memref<1x256xf32, #tpu.memory_space<vmem>>, vector<1x256xf32>
    %83 = vector.shape_cast %82 : vector<1x256xf32> to vector<256xf32>
    %84 = vector.shape_cast %83 : vector<256xf32> to vector<1x256xf32>
    %85 = vector.broadcast %84 : vector<1x256xf32> to vector<16x256xf32>
    %86 = arith.addf %81, %85 : vector<16x256xf32>
    %cst_37 = arith.constant 5.000000e-01 : f32
    %87 = vector.broadcast %cst_37 : f32 to vector<16x256xf32>
    %88 = arith.mulf %87, %86 : vector<16x256xf32>
    %cst_38 = arith.constant 0.707106769 : f32
    %89 = vector.broadcast %cst_38 : f32 to vector<16x256xf32>
    %90 = arith.mulf %86, %89 : vector<16x256xf32>
    %91 = math.erf %90 : vector<16x256xf32>
    %cst_39 = arith.constant 1.000000e+00 : f32
    %92 = vector.broadcast %cst_39 : f32 to vector<16x256xf32>
    %93 = arith.addf %92, %91 : vector<16x256xf32>
    %94 = arith.mulf %88, %93 : vector<16x256xf32>
    %95 = arith.truncf %94 : vector<16x256xf32> to vector<16x256xbf16>
    %c0_40 = arith.constant 0 : index
    %c0_41 = arith.constant 0 : index
    %96 = vector.load %arg12[%c0_40, %c0_41] : memref<256x128xbf16, #tpu.memory_space<vmem>>, vector<256x128xbf16>
    %cst_42 = arith.constant dense<0.000000e+00> : vector<16x128xf32>
    %97 = tpu.matmul %95, %96, %cst_42 {dimension_numbers = #tpu.dot_dimension_numbers<[1], [0], [0], [1], [0, 0, 1, 1], [], []>} : vector<16x256xbf16>, vector<256x128xbf16>, vector<16x128xf32> -> vector<16x128xf32>
    %c0_43 = arith.constant 0 : index
    %c0_44 = arith.constant 0 : index
    %98 = vector.load %arg13[%c0_43, %c0_44] : memref<1x128xf32, #tpu.memory_space<vmem>>, vector<1x128xf32>
    %99 = vector.shape_cast %98 : vector<1x128xf32> to vector<128xf32>
    %100 = vector.shape_cast %99 : vector<128xf32> to vector<1x128xf32>
    %101 = vector.broadcast %100 : vector<1x128xf32> to vector<16x128xf32>
    %102 = arith.addf %97, %101 : vector<16x128xf32>
    %103 = arith.addf %50, %102 : vector<16x128xf32>
    %c0_45 = arith.constant 0 : index
    %c0_46 = arith.constant 0 : index
    %c0_47 = arith.constant 0 : index
    %104 = vector.load %arg14[%c0_45, %c0_46, %c0_47] : memref<1x16x128xf32, #tpu.memory_space<vmem>>, vector<1x16x128xf32>
    %105 = vector.shape_cast %104 : vector<1x16x128xf32> to vector<16x128xf32>
    %106 = vector.shape_cast %103 : vector<16x128xf32> to vector<1x16x128xf32>
    tpu.vector_store %arg14[%c0_45, %c0_46, %c0_47], %106 {strides = array<i32>} : memref<1x16x128xf32, #tpu.memory_space<vmem>>, vector<1x16x128xf32>,
    return
  }
  func.func @transform_0(%arg0: i32) -> (i32, i32, i32) {
    %c0_i32 = arith.constant 0 : i32
    %c0_i32_0 = arith.constant 0 : i32
    %c0_i32_1 = arith.constant 0 : i32
    return %arg0, %c0_i32, %c0_i32_0 : i32, i32, i32
  }
  func.func @transform_1(%arg0: i32) -> (i32, i32) {
    %c0_i32 = arith.constant 0 : i32
    %c0_i32_0 = arith.constant 0 : i32
    %c0_i32_1 = arith.constant 0 : i32
    return %c0_i32, %c0_i32_0 : i32, i32
  }
  func.func @transform_2(%arg0: i32) -> (i32, i32) {
    %c0_i32 = arith.constant 0 : i32
    %c0_i32_0 = arith.constant 0 : i32
    %c0_i32_1 = arith.constant 0 : i32
    return %c0_i32, %c0_i32_0 : i32, i32
  }
  func.func @transform_3(%arg0: i32) -> (i32, i32) {
    %c0_i32 = arith.constant 0 : i32
    %c0_i32_0 = arith.constant 0 : i32
    %c0_i32_1 = arith.constant 0 : i32
    return %c0_i32, %c0_i32_0 : i32, i32
  }
  func.func @transform_4(%arg0: i32) -> (i32, i32) {
    %c0_i32 = arith.constant 0 : i32
    %c0_i32_0 = arith.constant 0 : i32
    %c0_i32_1 = arith.constant 0 : i32
    return %c0_i32, %c0_i32_0 : i32, i32
  }
  func.func @transform_5(%arg0: i32) -> (i32, i32) {
    %c0_i32 = arith.constant 0 : i32
    %c0_i32_0 = arith.constant 0 : i32
    %c0_i32_1 = arith.constant 0 : i32
    return %c0_i32, %c0_i32_0 : i32, i32
  }
  func.func @transform_6(%arg0: i32) -> (i32, i32) {
    %c0_i32 = arith.constant 0 : i32
    %c0_i32_0 = arith.constant 0 : i32
    %c0_i32_1 = arith.constant 0 : i32
    return %c0_i32, %c0_i32_0 : i32, i32
  }
  func.func @transform_7(%arg0: i32) -> (i32, i32) {
    %c0_i32 = arith.constant 0 : i32
    %c0_i32_0 = arith.constant 0 : i32
    %c0_i32_1 = arith.constant 0 : i32
    return %c0_i32, %c0_i32_0 : i32, i32
  }
  func.func @transform_8(%arg0: i32) -> (i32, i32) {
    %c0_i32 = arith.constant 0 : i32
    %c0_i32_0 = arith.constant 0 : i32
    %c0_i32_1 = arith.constant 0 : i32
    return %c0_i32, %c0_i32_0 : i32, i32
  }
  func.func @transform_9(%arg0: i32) -> (i32, i32) {
    %c0_i32 = arith.constant 0 : i32
    %c0_i32_0 = arith.constant 0 : i32
    %c0_i32_1 = arith.constant 0 : i32
    return %c0_i32, %c0_i32_0 : i32, i32
  }
  func.func @transform_10(%arg0: i32) -> (i32, i32) {
    %c0_i32 = arith.constant 0 : i32
    %c0_i32_0 = arith.constant 0 : i32
    %c0_i32_1 = arith.constant 0 : i32
    return %c0_i32, %c0_i32_0 : i32, i32
  }
  func.func @transform_11(%arg0: i32) -> (i32, i32) {
    %c0_i32 = arith.constant 0 : i32
    %c0_i32_0 = arith.constant 0 : i32
    %c0_i32_1 = arith.constant 0 : i32
    return %c0_i32, %c0_i32_0 : i32, i32
  }
  func.func @transform_12(%arg0: i32) -> (i32, i32) {
    %c0_i32 = arith.constant 0 : i32
    %c0_i32_0 = arith.constant 0 : i32
    %c0_i32_1 = arith.constant 0 : i32
    return %c0_i32, %c0_i32_0 : i32, i32
  }
  func.func @transform_13(%arg0: i32) -> (i32, i32, i32) {
    %c0_i32 = arith.constant 0 : i32
    %c0_i32_0 = arith.constant 0 : i32
    %c0_i32_1 = arith.constant 0 : i32
    return %arg0, %c0_i32, %c0_i32_0 : i32, i32, i32
  }
}

</mosaic_0001>

<llo_original>
// kernel: tpu_custom_call.1
$region0: #{tpu_custom_call.1}
  #allocation0 [shape = 'u32[]', space=smem, size = 0x4, offset = 0x4, fixed_abs, tag = 'smem constant byte address 0x4 - core index']
  #allocation1 [shape = 'u32[144,128]{1,0:T(1,128)}', space=vmem, size = 0x12000, scoped, tag = 'internal scratch']
  %s0 = inlined_call_operand.vmem [shape: f32[2,16,128], index: 0, kind: input, shape index: {}]
  %s1 = inlined_call_operand.vmem [shape: f32[1,128], index: 1, kind: input, shape index: {}]
  %s2 = inlined_call_operand.vmem [shape: f32[1,128], index: 2, kind: input, shape index: {}]
  %s3 = inlined_call_operand.vmem [shape: bf16[32,16], index: 3, kind: input, shape index: {}]
  %s4 = inlined_call_operand.vmem [shape: f32[32,1], index: 4, kind: input, shape index: {}]
  %s5 = inlined_call_operand.vmem [shape: bf16[16,32], index: 5, kind: input, shape index: {}]
  %s6 = inlined_call_operand.vmem [shape: f32[16,1], index: 6, kind: input, shape index: {}]
  %s7 = inlined_call_operand.vmem [shape: f32[1,128], index: 7, kind: input, shape index: {}]
  %s8 = inlined_call_operand.vmem [shape: f32[1,128], index: 8, kind: input, shape index: {}]
  %s9 = inlined_call_operand.hbm [shape: bf16[128,256], index: 9, kind: input, shape index: {}]
  %s10 = inlined_call_operand.vmem [shape: f32[1,256], index: 10, kind: input, shape index: {}]
  %s11 = inlined_call_operand.hbm [shape: bf16[256,128], index: 11, kind: input, shape index: {}]
  %s12 = inlined_call_operand.vmem [shape: f32[1,128], index: 12, kind: input, shape index: {}]
  %s13 = inlined_call_operand.hbm [shape: f32[2,16,128], index: 13, kind: output, shape index: {}]
  %s14 = sld [smem:[#allocation0]]
  $region93: #{tpu_custom_call.1} parent=0
    _
  %s16 = ssub.s32 1, %s14
  %s17 = scalar_select 0, %s16, %s14
  $region1: #{tpu_custom_call.1} parent=0
    #allocation2 [shape = 'u8[65536]{0}', space=vmem, size = 0x10000, scoped, tag = 'input window, operand 9, single buffered']
    #allocation3 [shape = 's32[2]{0}', space=sflag, size = 0x8, scoped, tag = 'scoped memory for tpu_custom_call.1']
    #allocation4 [shape = 's32[2]{0}', space=sflag, size = 0x8, scoped, tag = 'scoped memory for tpu_custom_call.1']
    #allocation5 [shape = 'u8[65536]{0}', space=vmem, size = 0x10000, scoped, tag = 'input window, operand 11, single buffered']
    #allocation6 [shape = 's32[1]{0}', space=sflag, size = 0x4, scoped, tag = 'scoped memory for tpu_custom_call.1']
    #allocation7 [shape = 'u8[16384]{0}', space=vmem, size = 0x4000, scoped, tag = 'output window, operand 0']
    %18 = vsyncpa [#allocation3], 0
    %19 = vsyncpa [#allocation6], 0
    %20 = vsyncpa [#allocation4], 0
    %s21 = scalar_lea.sflag [#allocation4], 1
    %22 = vsyncpa %s21, 0
    loop: start=0, step=1, limit=4
    $region2: #{tpu_custom_call.1} parent=1 // loop_pre_header
      _
    $region3: #{tpu_custom_call.1} parent=1 // loop_header
      %s24 = sphi 0, %s28
      %p25 = scmp.ge.s32.totalorder %s24, 4
      %s34 = sphi 0, %s36
      %s37 = sphi 0, %s34
      %s38 = sphi 0, %s37
      %s54 = sphi 0, %s38
      %s58 = sphi 0, %s58
      %s60 = sphi 0, %s58
      %s61 = sphi 0, %s60
      %s75 = sphi 0, %s61
      %s79 = sphi 0, %s79
      %s81 = sphi 0, %s79
      %s82 = sphi 0, %s81
      %s96 = sphi 0, %s82
      %s100 = sphi 0, %s100
      %s102 = sphi 0, %s100
      %s103 = sphi 0, %s102
      %s117 = sphi 0, %s103
      %s121 = sphi 0, %s121
      %s123 = sphi 0, %s121
      %s124 = sphi 0, %s123
      %s138 = sphi 0, %s124
      %s142 = sphi 0, %s142
      %s144 = sphi 0, %s142
      %s145 = sphi 0, %s144
      %s159 = sphi 0, %s145
      %s163 = sphi 0, %s163
      %s165 = sphi 0, %s163
      %s166 = sphi 0, %s165
      %s180 = sphi 0, %s166
      %s184 = sphi 0, %s184
      %s186 = sphi 0, %s184
      %s187 = sphi 0, %s186
      %s201 = sphi 0, %s187
      %s205 = sphi 0, %s205
      %s207 = sphi 0, %s205
      %s208 = sphi 0, %s207
      %s222 = sphi 0, %s208
      %s226 = sphi 0, %s226
      %s228 = sphi 0, %s226
      %s229 = sphi 0, %s228
      %s243 = sphi 0, %s229
      %s247 = sphi 0, %s247
      %s249 = sphi 0, %s247
      %s250 = sphi 0, %s249
      %s264 = sphi 0, %s250
      %s268 = sphi 0, %s268
      %s270 = sphi 0, %s268
      %s271 = sphi 0, %s270
      %s285 = sphi 0, %s271
      %s289 = sphi 0, %s289
      %s291 = sphi 0, %s289
      %s292 = sphi 0, %s291
      %s306 = sphi 0, %s292
      %s312 = sphi 0, %s314
      %s315 = sphi 0, %s312
      %s316 = sphi 0, %s315
      %s332 = sphi 0, %s316
    $region4: #{tpu_custom_call.1} parent=1 // loop_header_branch
      %27 = sbr.rel (%p25) target = $region8
    $region5: #{tpu_custom_call.1} parent=1 // loop_body
      %s29 = ssub.s32 %s24, 1
      %s30 = ssub.s32 %s24, 2
      %s31 = sadd.s32 %s24, 1
      %s32 = ssub.s32 %s24, %s31
      %p33 = scmp.eq.s32.totalorder %s32, 0
      %s35 = sadd.s32 %s34, 1
      %s36 = scalar_select %p33, %s34, %s35
      %p39 = pneg %p33
      %p40 = scmp.eq.s32.totalorder %s24, 1
      %p41 = por %p39, %p40
      %p42 = scmp.ne.s32.totalorder %s34, %s37
      %p43 = scmp.eq.s32.totalorder %s24, 0
      %p44 = por %p42, %p43
      %p45 = scmp.ne.s32.totalorder %s34, %s37
      %p46 = scmp.eq.s32.totalorder %s29, 1
      %p47 = por %p45, %p46
      %p48 = scmp.ne.s32.totalorder %s37, %s38
      %p49 = scmp.eq.s32.totalorder %s29, 0
      %p50 = por %p48, %p49
      %p51 = scmp.ne.s32.totalorder %s37, %s38
      %p52 = scmp.eq.s32.totalorder %s30, 1
      %p53 = por %p51, %p52
      %p55 = scmp.ne.s32.totalorder %s38, %s54
      %p56 = scmp.eq.s32.totalorder %s30, 0
      %p57 = por %p55, %p56
      %s59 = sadd.s32 %s58, 1
      %p62 = scmp.eq.s32.totalorder %s24, 1
      %p63 = scmp.ne.s32.totalorder %s58, %s60
      %p64 = scmp.eq.s32.totalorder %s24, 0
      %p65 = por %p63, %p64
      %p66 = scmp.ne.s32.totalorder %s58, %s60
      %p67 = scmp.eq.s32.totalorder %s29, 1
      %p68 = por %p66, %p67
      %p69 = scmp.ne.s32.totalorder %s60, %s61
      %p70 = scmp.eq.s32.totalorder %s29, 0
      %p71 = por %p69, %p70
      %p72 = scmp.ne.s32.totalorder %s60, %s61
      %p73 = scmp.eq.s32.totalorder %s30, 1
      %p74 = por %p72, %p73
      %p76 = scmp.ne.s32.totalorder %s61, %s75
      %p77 = scmp.eq.s32.totalorder %s30, 0
      %p78 = por %p76, %p77
      %s80 = sadd.s32 %s79, 1
      %p83 = scmp.eq.s32.totalorder %s24, 1
      %p84 = scmp.ne.s32.totalorder %s79, %s81
      %p85 = scmp.eq.s32.totalorder %s24, 0
      %p86 = por %p84, %p85
      %p87 = scmp.ne.s32.totalorder %s79, %s81
      %p88 = scmp.eq.s32.totalorder %s29, 1
      %p89 = por %p87, %p88
      %p90 = scmp.ne.s32.totalorder %s81, %s82
      %p91 = scmp.eq.s32.totalorder %s29, 0
      %p92 = por %p90, %p91
      %p93 = scmp.ne.s32.totalorder %s81, %s82
      %p94 = scmp.eq.s32.totalorder %s30, 1
      %p95 = por %p93, %p94
      %p97 = scmp.ne.s32.totalorder %s82, %s96
      %p98 = scmp.eq.s32.totalorder %s30, 0
      %p99 = por %p97, %p98
      %s101 = sadd.s32 %s100, 1
      %p104 = scmp.eq.s32.totalorder %s24, 1
      %p105 = scmp.ne.s32.totalorder %s100, %s102
      %p106 = scmp.eq.s32.totalorder %s24, 0
      %p107 = por %p105, %p106
      %p108 = scmp.ne.s32.totalorder %s100, %s102
      %p109 = scmp.eq.s32.totalorder %s29, 1
      %p110 = por %p108, %p109
      %p111 = scmp.ne.s32.totalorder %s102, %s103
      %p112 = scmp.eq.s32.totalorder %s29, 0
      %p113 = por %p111, %p112
      %p114 = scmp.ne.s32.totalorder %s102, %s103
      %p115 = scmp.eq.s32.totalorder %s30, 1
      %p116 = por %p114, %p115
      %p118 = scmp.ne.s32.totalorder %s103, %s117
      %p119 = scmp.eq.s32.totalorder %s30, 0
      %p120 = por %p118, %p119
      %s122 = sadd.s32 %s121, 1
      %p125 = scmp.eq.s32.totalorder %s24, 1
      %p126 = scmp.ne.s32.totalorder %s121, %s123
      %p127 = scmp.eq.s32.totalorder %s24, 0
      %p128 = por %p126, %p127
      %p129 = scmp.ne.s32.totalorder %s121, %s123
      %p130 = scmp.eq.s32.totalorder %s29, 1
      %p131 = por %p129, %p130
      %p132 = scmp.ne.s32.totalorder %s123, %s124
      %p133 = scmp.eq.s32.totalorder %s29, 0
      %p134 = por %p132, %p133
      %p135 = scmp.ne.s32.totalorder %s123, %s124
      %p136 = scmp.eq.s32.totalorder %s30, 1
      %p137 = por %p135, %p136
      %p139 = scmp.ne.s32.totalorder %s124, %s138
      %p140 = scmp.eq.s32.totalorder %s30, 0
      %p141 = por %p139, %p140
      %s143 = sadd.s32 %s142, 1
      %p146 = scmp.eq.s32.totalorder %s24, 1
      %p147 = scmp.ne.s32.totalorder %s142, %s144
      %p148 = scmp.eq.s32.totalorder %s24, 0
      %p149 = por %p147, %p148
      %p150 = scmp.ne.s32.totalorder %s142, %s144
      %p151 = scmp.eq.s32.totalorder %s29, 1
      %p152 = por %p150, %p151
      %p153 = scmp.ne.s32.totalorder %s144, %s145
      %p154 = scmp.eq.s32.totalorder %s29, 0
      %p155 = por %p153, %p154
      %p156 = scmp.ne.s32.totalorder %s144, %s145
      %p157 = scmp.eq.s32.totalorder %s30, 1
      %p158 = por %p156, %p157
      %p160 = scmp.ne.s32.totalorder %s145, %s159
      %p161 = scmp.eq.s32.totalorder %s30, 0
      %p162 = por %p160, %p161
      %s164 = sadd.s32 %s163, 1
      %p167 = scmp.eq.s32.totalorder %s24, 1
      %p168 = scmp.ne.s32.totalorder %s163, %s165
      %p169 = scmp.eq.s32.totalorder %s24, 0
      %p170 = por %p168, %p169
      %p171 = scmp.ne.s32.totalorder %s163, %s165
      %p172 = scmp.eq.s32.totalorder %s29, 1
      %p173 = por %p171, %p172
      %p174 = scmp.ne.s32.totalorder %s165, %s166
      %p175 = scmp.eq.s32.totalorder %s29, 0
      %p176 = por %p174, %p175
      %p177 = scmp.ne.s32.totalorder %s165, %s166
      %p178 = scmp.eq.s32.totalorder %s30, 1
      %p179 = por %p177, %p178
      %p181 = scmp.ne.s32.totalorder %s166, %s180
      %p182 = scmp.eq.s32.totalorder %s30, 0
      %p183 = por %p181, %p182
      %s185 = sadd.s32 %s184, 1
      %p188 = scmp.eq.s32.totalorder %s24, 1
      %p189 = scmp.ne.s32.totalorder %s184, %s186
      %p190 = scmp.eq.s32.totalorder %s24, 0
      %p191 = por %p189, %p190
      %p192 = scmp.ne.s32.totalorder %s184, %s186
      %p193 = scmp.eq.s32.totalorder %s29, 1
      %p194 = por %p192, %p193
      %p195 = scmp.ne.s32.totalorder %s186, %s187
      %p196 = scmp.eq.s32.totalorder %s29, 0
      %p197 = por %p195, %p196
      %p198 = scmp.ne.s32.totalorder %s186, %s187
      %p199 = scmp.eq.s32.totalorder %s30, 1
      %p200 = por %p198, %p199
      %p202 = scmp.ne.s32.totalorder %s187, %s201
      %p203 = scmp.eq.s32.totalorder %s30, 0
      %p204 = por %p202, %p203
      %s206 = sadd.s32 %s205, 1
      %p209 = scmp.eq.s32.totalorder %s24, 1
      %p210 = scmp.ne.s32.totalorder %s205, %s207
      %p211 = scmp.eq.s32.totalorder %s24, 0
      %p212 = por %p210, %p211
      %p213 = scmp.ne.s32.totalorder %s205, %s207
      %p214 = scmp.eq.s32.totalorder %s29, 1
      %p215 = por %p213, %p214
      %p216 = scmp.ne.s32.totalorder %s207, %s208
      %p217 = scmp.eq.s32.totalorder %s29, 0
      %p218 = por %p216, %p217
      %p219 = scmp.ne.s32.totalorder %s207, %s208
      %p220 = scmp.eq.s32.totalorder %s30, 1
      %p221 = por %p219, %p220
      %p223 = scmp.ne.s32.totalorder %s208, %s222
      %p224 = scmp.eq.s32.totalorder %s30, 0
      %p225 = por %p223, %p224
      %s227 = sadd.s32 %s226, 1
      %p230 = scmp.eq.s32.totalorder %s24, 1
      %p231 = scmp.ne.s32.totalorder %s226, %s228
      %p232 = scmp.eq.s32.totalorder %s24, 0
      %p233 = por %p231, %p232
      %p234 = scmp.ne.s32.totalorder %s226, %s228
      %p235 = scmp.eq.s32.totalorder %s29, 1
      %p236 = por %p234, %p235
      %p237 = scmp.ne.s32.totalorder %s228, %s229
      %p238 = scmp.eq.s32.totalorder %s29, 0
      %p239 = por %p237, %p238
      %p240 = scmp.ne.s32.totalorder %s228, %s229
      %p241 = scmp.eq.s32.totalorder %s30, 1
      %p242 = por %p240, %p241
      %p244 = scmp.ne.s32.totalorder %s229, %s243
      %p245 = scmp.eq.s32.totalorder %s30, 0
      %p246 = por %p244, %p245
      %s248 = sadd.s32 %s247, 1
      %p251 = scmp.eq.s32.totalorder %s24, 1
      %p252 = scmp.ne.s32.totalorder %s247, %s249
      %p253 = scmp.eq.s32.totalorder %s24, 0
      %p254 = por %p252, %p253
      %p255 = scmp.ne.s32.totalorder %s247, %s249
      %p256 = scmp.eq.s32.totalorder %s29, 1
      %p257 = por %p255, %p256
      %p258 = scmp.ne.s32.totalorder %s249, %s250
      %p259 = scmp.eq.s32.totalorder %s29, 0
      %p260 = por %p258, %p259
      %p261 = scmp.ne.s32.totalorder %s249, %s250
      %p262 = scmp.eq.s32.totalorder %s30, 1
      %p263 = por %p261, %p262
      %p265 = scmp.ne.s32.totalorder %s250, %s264
      %p266 = scmp.eq.s32.totalorder %s30, 0
      %p267 = por %p265, %p266
      %s269 = sadd.s32 %s268, 1
      %p272 = scmp.eq.s32.totalorder %s24, 1
      %p273 = scmp.ne.s32.totalorder %s268, %s270
      %p274 = scmp.eq.s32.totalorder %s24, 0
      %p275 = por %p273, %p274
      %p276 = scmp.ne.s32.totalorder %s268, %s270
      %p277 = scmp.eq.s32.totalorder %s29, 1
      %p278 = por %p276, %p277
      %p279 = scmp.ne.s32.totalorder %s270, %s271
      %p280 = scmp.eq.s32.totalorder %s29, 0
      %p281 = por %p279, %p280
      %p282 = scmp.ne.s32.totalorder %s270, %s271
      %p283 = scmp.eq.s32.totalorder %s30, 1
      %p284 = por %p282, %p283
      %p286 = scmp.ne.s32.totalorder %s271, %s285
      %p287 = scmp.eq.s32.totalorder %s30, 0
      %p288 = por %p286, %p287
      %s290 = sadd.s32 %s289, 1
      %p293 = scmp.eq.s32.totalorder %s24, 1
      %p294 = scmp.ne.s32.totalorder %s289, %s291
      %p295 = scmp.eq.s32.totalorder %s24, 0
      %p296 = por %p294, %p295
      %p297 = scmp.ne.s32.totalorder %s289, %s291
      %p298 = scmp.eq.s32.totalorder %s29, 1
      %p299 = por %p297, %p298
      %p300 = scmp.ne.s32.totalorder %s291, %s292
      %p301 = scmp.eq.s32.totalorder %s29, 0
      %p302 = por %p300, %p301
      %p303 = scmp.ne.s32.totalorder %s291, %s292
      %p304 = scmp.eq.s32.totalorder %s30, 1
      %p305 = por %p303, %p304
      %p307 = scmp.ne.s32.totalorder %s292, %s306
      %p308 = scmp.eq.s32.totalorder %s30, 0
      %p309 = por %p307, %p308
      %s310 = ssub.s32 %s24, %s31
      %p311 = scmp.eq.s32.totalorder %s310, 0
      %s313 = sadd.s32 %s312, 1
      %s314 = scalar_select %p311, %s312, %s313
      %p317 = pneg %p311
      %p318 = scmp.eq.s32.totalorder %s24, 1
      %p319 = por %p317, %p318
      %p320 = scmp.ne.s32.totalorder %s312, %s315
      %p321 = scmp.eq.s32.totalorder %s24, 0
      %p322 = por %p320, %p321
      %p323 = scmp.ne.s32.totalorder %s312, %s315
      %p324 = scmp.eq.s32.totalorder %s29, 1
      %p325 = por %p323, %p324
      %p326 = scmp.ne.s32.totalorder %s315, %s316
      %p327 = scmp.eq.s32.totalorder %s29, 0
      %p328 = por %p326, %p327
      %p329 = scmp.ne.s32.totalorder %s315, %s316
      %p330 = scmp.eq.s32.totalorder %s30, 1
      %p331 = por %p329, %p330
      %p333 = scmp.ne.s32.totalorder %s316, %s332
      %p334 = scmp.eq.s32.totalorder %s30, 0
      %p335 = por %p333, %p334
      %p336 = scmp.le.s32.totalorder 1, %s24
      %p337 = scmp.lt.s32.totalorder %s24, 3
      %p338 = pnand %p336, %p337
      %p339 = pneg %p338
      // Predicated region
      $region9: #{tpu_custom_call.1} parent=5 // pred_check
        _
      $region10: #{tpu_custom_call.1} parent=5 // pred_check_branch
        %341 = sbr.rel (%p338) target = $region12
      $region11: #{tpu_custom_call.1} parent=5 // pred_region
        %s342 = ssub.s32 %s24, 1
        // Predicated region
        $region13: #{tpu_custom_call.1} parent=11 // pred_check
          %p343 = pneg %p71
        $region14: #{tpu_custom_call.1} parent=11 // pred_check_branch
          %345 = sbr.rel (%p343) target = $region16
        $region15: #{tpu_custom_call.1} parent=11 // pred_region
          _
        $region16: #{tpu_custom_call.1} parent=11 // pred_fallthru
          _
        // Predicated region
        $region17: #{tpu_custom_call.1} parent=11 // pred_check
          %p346 = pneg %p92
        $region18: #{tpu_custom_call.1} parent=11 // pred_check_branch
          %348 = sbr.rel (%p346) target = $region20
        $region19: #{tpu_custom_call.1} parent=11 // pred_region
          _
        $region20: #{tpu_custom_call.1} parent=11 // pred_fallthru
          _
        // Predicated region
        $region21: #{tpu_custom_call.1} parent=11 // pred_check
          %p349 = pneg %p113
        $region22: #{tpu_custom_call.1} parent=11 // pred_check_branch
          %351 = sbr.rel (%p349) target = $region24
        $region23: #{tpu_custom_call.1} parent=11 // pred_region
          _
        $region24: #{tpu_custom_call.1} parent=11 // pred_fallthru
          _
        // Predicated region
        $region25: #{tpu_custom_call.1} parent=11 // pred_check
          %p352 = pneg %p134
        $region26: #{tpu_custom_call.1} parent=11 // pred_check_branch
          %354 = sbr.rel (%p352) target = $region28
        $region27: #{tpu_custom_call.1} parent=11 // pred_region
          _
        $region28: #{tpu_custom_call.1} parent=11 // pred_fallthru
          _
        // Predicated region
        $region29: #{tpu_custom_call.1} parent=11 // pred_check
          %p355 = pneg %p155
        $region30: #{tpu_custom_call.1} parent=11 // pred_check_branch
          %357 = sbr.rel (%p355) target = $region32
        $region31: #{tpu_custom_call.1} parent=11 // pred_region
          _
        $region32: #{tpu_custom_call.1} parent=11 // pred_fallthru
          _
        // Predicated region
        $region33: #{tpu_custom_call.1} parent=11 // pred_check
          %p358 = pneg %p176
        $region34: #{tpu_custom_call.1} parent=11 // pred_check_branch
          %360 = sbr.rel (%p358) target = $region36
        $region35: #{tpu_custom_call.1} parent=11 // pred_region
          _
        $region36: #{tpu_custom_call.1} parent=11 // pred_fallthru
          _
        // Predicated region
        $region37: #{tpu_custom_call.1} parent=11 // pred_check
          %p361 = pneg %p197
        $region38: #{tpu_custom_call.1} parent=11 // pred_check_branch
          %363 = sbr.rel (%p361) target = $region40
        $region39: #{tpu_custom_call.1} parent=11 // pred_region
          _
        $region40: #{tpu_custom_call.1} parent=11 // pred_fallthru
          _
        // Predicated region
        $region41: #{tpu_custom_call.1} parent=11 // pred_check
          %p364 = pneg %p218
        $region42: #{tpu_custom_call.1} parent=11 // pred_check_branch
          %366 = sbr.rel (%p364) target = $region44
        $region43: #{tpu_custom_call.1} parent=11 // pred_region
          _
        $region44: #{tpu_custom_call.1} parent=11 // pred_fallthru
          _
        // Predicated region
        $region45: #{tpu_custom_call.1} parent=11 // pred_check
          %p367 = pneg %p239
        $region46: #{tpu_custom_call.1} parent=11 // pred_check_branch
          %369 = sbr.rel (%p367) target = $region48
        $region47: #{tpu_custom_call.1} parent=11 // pred_region
          %s371 = ssub.s32 2048, 2048
          %372 = vsyncadd [#allocation3], %s371
          %s373 = sshll.u32 [#allocation2], 4
          %s374 = int_to_ptr.vmem [resolvable:$true] %s373
          %379 = dma.hbm_to_vmem [thread:$0]  %s9, 2048, %s374, [#allocation3], 128, 128, 8
        $region48: #{tpu_custom_call.1} parent=11 // pred_fallthru
          _
        // Predicated region
        $region49: #{tpu_custom_call.1} parent=11 // pred_check
          %p380 = pneg %p260
        $region50: #{tpu_custom_call.1} parent=11 // pred_check_branch
          %382 = sbr.rel (%p380) target = $region52
        $region51: #{tpu_custom_call.1} parent=11 // pred_region
          _
        $region52: #{tpu_custom_call.1} parent=11 // pred_fallthru
          _
        // Predicated region
        $region53: #{tpu_custom_call.1} parent=11 // pred_check
          %p383 = pneg %p281
        $region54: #{tpu_custom_call.1} parent=11 // pred_check_branch
          %385 = sbr.rel (%p383) target = $region56
        $region55: #{tpu_custom_call.1} parent=11 // pred_region
          %s387 = ssub.s32 2048, 2048
          %388 = vsyncadd [#allocation6], %s387
          %s389 = sshll.u32 [#allocation5], 4
          %s390 = int_to_ptr.vmem [resolvable:$true] %s389
          %395 = dma.hbm_to_vmem [thread:$0]  %s11, 2048, %s390, [#allocation6], 64, 64, 4
        $region56: #{tpu_custom_call.1} parent=11 // pred_fallthru
          _
        // Predicated region
        $region57: #{tpu_custom_call.1} parent=11 // pred_check
          %p396 = pneg %p302
        $region58: #{tpu_custom_call.1} parent=11 // pred_check_branch
          %398 = sbr.rel (%p396) target = $region60
        $region59: #{tpu_custom_call.1} parent=11 // pred_region
          _
        $region60: #{tpu_custom_call.1} parent=11 // pred_fallthru
          _
      $region12: #{tpu_custom_call.1} parent=5 // pred_fallthru
        _
      %p399 = scmp.lt.s32.totalorder %s24, 2
      // Predicated region
      $region61: #{tpu_custom_call.1} parent=5 // pred_check
        %p400 = pneg %p399
      $region62: #{tpu_custom_call.1} parent=5 // pred_check_branch
        %402 = sbr.rel (%p400) target = $region64
      $region63: #{tpu_custom_call.1} parent=5 // pred_region
        // Predicated region
        $region65: #{tpu_custom_call.1} parent=63 // pred_check
          %p403 = pneg %p44
        $region66: #{tpu_custom_call.1} parent=63 // pred_check_branch
          %405 = sbr.rel (%p403) target = $region68
        $region67: #{tpu_custom_call.1} parent=63 // pred_region
          %p406 = scmp.lt.s32.totalorder %s24, 1
          %s407 = scalar_select %p406, %s24, 1
          %s408 = smul.addr %s407, 2
          %s409 = smul.addr %s408, 8
          %s410 = scalar_lea.vmem %s0, %s409
        $region68: #{tpu_custom_call.1} parent=63 // pred_fallthru
          _
      $region64: #{tpu_custom_call.1} parent=5 // pred_fallthru
        _
      %p411 = scmp.le.s32.totalorder 1, %s24
      %p412 = scmp.lt.s32.totalorder %s24, 3
      %p413 = pnand %p411, %p412
      %p414 = pneg %p413
      // Predicated region
      $region69: #{tpu_custom_call.1} parent=5 // pred_check
        _
      $region70: #{tpu_custom_call.1} parent=5 // pred_check_branch
        %416 = sbr.rel (%p413) target = $region72
      $region71: #{tpu_custom_call.1} parent=5 // pred_region
        %s417 = ssub.s32 %s24, 1
        // Predicated region
        $region73: #{tpu_custom_call.1} parent=71 // pred_check
          %p418 = pneg %p239
        $region74: #{tpu_custom_call.1} parent=71 // pred_check_branch
          %420 = sbr.rel (%p418) target = $region76
        $region75: #{tpu_custom_call.1} parent=71 // pred_region
          %421 = dma.done [#allocation3], 2048
        $region76: #{tpu_custom_call.1} parent=71 // pred_fallthru
          _
        // Predicated region
        $region77: #{tpu_custom_call.1} parent=71 // pred_check
          %p422 = pneg %p281
        $region78: #{tpu_custom_call.1} parent=71 // pred_check_branch
          %424 = sbr.rel (%p422) target = $region80
        $region79: #{tpu_custom_call.1} parent=71 // pred_region
          %425 = dma.done [#allocation6], 2048
        $region80: #{tpu_custom_call.1} parent=71 // pred_fallthru
          _
        %p426 = scmp.lt.s32.totalorder %s29, 1
        %s427 = scalar_select %p426, %s29, 1
        %s428 = smul.addr %s427, 2
        %s429 = smul.addr %s428, 8
        %s430 = scalar_lea.vmem %s0, %s429
        %p431 = pneg %p50
        %p432 = pneg %p47
        %p433 = pneg %p71
        %p434 = pneg %p68
        %p435 = pneg %p92
        %p436 = pneg %p89
        %p437 = pneg %p113
        %p438 = pneg %p110
        %p439 = pneg %p134
        %p440 = pneg %p131
        %p441 = pneg %p155
        %p442 = pneg %p152
        %p443 = pneg %p176
        %p444 = pneg %p173
        %p445 = pneg %p197
        %p446 = pneg %p194
        %p447 = pneg %p218
        %p448 = pneg %p215
        %p449 = pneg %p239
        %p450 = pneg %p236
        %p451 = pneg %p260
        %p452 = pneg %p257
        %p453 = pneg %p281
        %p454 = pneg %p278
        %p455 = pneg %p302
        %p456 = pneg %p299
        %p457 = pneg %p328
        %p458 = pneg %p325
        %s459 = sand.u32 %s315, 1
        %s460 = scalar_lea.sflag [#allocation4], %s459
        %s461 = sand.u32 %s315, 1
        %s462 = smul.addr %s461, 16
        %s463 = scalar_lea.vmem [#allocation7], %s462
        %p464 = scmp.lt.s32.totalorder %s29, 1
        %s465 = scalar_select %p464, %s29, 1
        %s466 = smul.addr %s465, 2
        %s467 = smul.addr %s466, 8
        %s468 = scalar_lea.vmem %s0, %s467
        %v470 = vld [vmem:[%s468] sm:$0xff]
        %v471 = vld [vmem:[%s468 + $0x8] sm:$0xff]
        %v472 = vld [vmem:[%s1] sm:$0x1]
        %v473 = vld [vmem:[%s2] sm:$0x1]
        %474 = vadd.xlane.f32.xlu0 %v470
        %v475 = vpop.xlane.xlu0 %474
        %476 = vadd.xlane.f32.xlu0 %v471
        %v477 = vpop.xlane.xlu0 %476
        %v478 = vrcp.pop 128.0
        %v479 = vmul.f32 %v475, %v478
        %v480 = vmul.f32 %v477, %v478
        %v481 = vsub.f32 %v470, %v479
        %v482 = vsub.f32 %v471, %v480
        %v483 = vmul.f32 %v481, %v481
        %v484 = vmul.f32 %v482, %v482
        %485 = vadd.xlane.f32.xlu0 %v483
        %v486 = vpop.xlane.xlu0 %485
        %487 = vadd.xlane.f32.xlu0 %v484
        %v488 = vpop.xlane.xlu0 %487
        %v489 = vmul.f32 %v486, %v478
        %v490 = vmul.f32 %v488, %v478
        %v491 = vadd.f32 %v489, 1e-05
        %v492 = vadd.f32 %v490, 1e-05
        %v493 = vrsqrt.pop %v491
        %v494 = vrsqrt.pop %v492
        %v495 = vmul.f32 %v481, %v493
        %v496 = vmul.f32 %v482, %v494
        %v498 = vlaneseq
        %v499 = vshrl.u32 %v498, 7
        %v500 = vsub.s32 0, %v499
        %v501 = vrot.slane %v472, %v500
        %v503 = vmul.f32 %v495, %v501
        %v504 = vmul.f32 %v496, %v501
        %v506 = vlaneseq
        %v507 = vshrl.u32 %v506, 7
        %v508 = vsub.s32 0, %v507
        %v509 = vrot.slane %v473, %v508
        %v511 = vadd.f32 %v503, %v509
        %v512 = vadd.f32 %v504, %v509
        %v513 = vpack.c.bf16 %v512, %v511
        %v514 = vld [vmem:[%s3] sm:$0xf]
        %v515 = vld [vmem:[%s3 + $0x4] sm:$0xf]
        %v516 = vld [vmem:[%s3 + $0x8] sm:$0xf]
        %v517 = vld [vmem:[%s3 + $0xc] sm:$0xf]
        %v518 = vld [vmem:[%s4] sm:$0xff]
        %v519 = vld [vmem:[%s4 + $0x8] sm:$0xff]
        %v520 = vld [vmem:[%s4 + $0x10] sm:$0xff]
        %v521 = vld [vmem:[%s4 + $0x18] sm:$0xff]
        %523 = vset.pattern.permute.xlu0 0
        %524 = vperm.xlu0 %523, %v518
        %v525 = vpop.permute.xlu0 %524
        %528 = vset.pattern.permute.xlu0 0
        %529 = vperm.xlu0 %528, %v519
        %v530 = vpop.permute.xlu0 %529
        %533 = vset.pattern.permute.xlu0 0
        %534 = vperm.xlu0 %533, %v520
        %v535 = vpop.permute.xlu0 %534
        %538 = vset.pattern.permute.xlu0 0
        %539 = vperm.xlu0 %538, %v521
        %v540 = vpop.permute.xlu0 %539
        %v546 = vunpack.c.l.b16 %v514
        %v547 = vunpack.c.l.b16 %v515
        %v548 = vunpack.c.l.b16 %v516
        %v549 = vunpack.c.l.b16 %v517
        %v550 = vpack.c.b16 %v547, %v546
        %v551 = vpack.c.b16 %v549, %v548
        %vm552 = vcmask 130048
        %v554 = vsel %vm552, %v550, 0
        %v557 = vsel %vm552, %v551, 0
        %559 = vmatprep.subr.bf16.mxu0 0
        %560 = vmatpush1.bf16.msra.mxu0 %v513
        %561 = vmatprep.subr.bf16.mxu0 0
        %562 = vmatpush1.bf16.msra.mxu0 0
        %563 = vmatprep.subr.bf16.mxu0 0
        %564 = vmatpush1.bf16.msra.mxu0 0
        %565 = vmatprep.subr.bf16.mxu0 0
        %566 = vmatpush1.bf16.msra.mxu0 0
        %567 = vmatprep.subr.bf16.mxu0 0
        %568 = vmatpush1.bf16.msra.mxu0 0
        %569 = vmatprep.subr.bf16.mxu0 0
        %570 = vmatpush1.bf16.msra.mxu0 0
        %571 = vmatprep.subr.bf16.mxu0 0
        %572 = vmatpush1.bf16.msra.mxu0 0
        %573 = vmatprep.subr.bf16.mxu0 0
        %574 = vmatpush1.bf16.msra.mxu0 0
        %575 = vmatprep.subr.bf16.mxu0 0
        %576 = vmatpush1.bf16.msra.mxu0 0
        %577 = vmatprep.subr.bf16.mxu0 0
        %578 = vmatpush1.bf16.msra.mxu0 0
        %579 = vmatprep.subr.bf16.mxu0 0
        %580 = vmatpush1.bf16.msra.mxu0 0
        %581 = vmatprep.subr.bf16.mxu0 0
        %582 = vmatpush1.bf16.msra.mxu0 0
        %583 = vmatprep.subr.bf16.mxu0 0
        %584 = vmatpush1.bf16.msra.mxu0 0
        %585 = vmatprep.subr.bf16.mxu0 0
        %586 = vmatpush1.bf16.msra.mxu0 0
        %587 = vmatprep.subr.bf16.mxu0 0
        %588 = vmatpush1.bf16.msra.mxu0 0
        %589 = vmatprep.subr.bf16.mxu0 0
        %590 = vmatpush1.bf16.msra.mxu0 0
        %591 = vmatprep.mubr.bf16.mxu0 0
        %592 = vmatmul.mubr.bf16.gmra.mrb[0].mxu0 %v554
        %v593 = vpop.f32.mrb[0].mxu0
        %v594 = vadd.f32 %v525, %v593
        %v595 = vpop.f32.mrb[0].mxu0
        %v596 = vpop.f32.mrb[0].mxu0
        %v597 = vadd.f32 %v530, %v596
        %v598 = vpop.f32.mrb[0].mxu0
        %599 = vmatprep.mubr.bf16.mxu0 0
        %600 = vmatmul.mubr.bf16.gmra.mrb[0].mxu0 %v557
        %v601 = vpop.f32.mrb[0].mxu0
        %v602 = vadd.f32 %v535, %v601
        %v603 = vpop.f32.mrb[0].mxu0
        %v604 = vpop.f32.mrb[0].mxu0
        %v605 = vadd.f32 %v540, %v604
        %v606 = vpop.f32.mrb[0].mxu0
        %607 = vdwg.mxu0
        %v608 = vmul.f32 %v594, 0.5
        %v609 = vmul.f32 %v597, 0.5
        %v610 = vmul.f32 %v602, 0.5
        %v611 = vmul.f32 %v605, 0.5
        %v612 = vmul.f32 %v594, 0.70710677
        %v613 = vmul.f32 %v597, 0.70710677
        %v614 = vmul.f32 %v602, 0.70710677
        %v615 = vmul.f32 %v605, 0.70710677
        %v616 = verf.f32.pop %v612
        %v617 = verf.f32.pop %v613
        %v618 = verf.f32.pop %v614
        %v619 = verf.f32.pop %v615
        %v620 = vadd.f32 %v616, 1.0
        %v621 = vadd.f32 %v617, 1.0
        %v622 = vadd.f32 %v618, 1.0
        %v623 = vadd.f32 %v619, 1.0
        %v624 = vmul.f32 %v608, %v620
        %v625 = vmul.f32 %v609, %v621
        %v626 = vmul.f32 %v610, %v622
        %v627 = vmul.f32 %v611, %v623
        %v628 = vld [vmem:[%s5] sm:$0xf]
        %v629 = vld [vmem:[%s5 + $0x4] sm:$0xf]
        %v630 = vpack.c.bf16 %v625, %v624
        %v631 = vpack.c.bf16 %v627, %v626
        %v632 = vld [vmem:[%s6] sm:$0xff]
        %v633 = vld [vmem:[%s6 + $0x8] sm:$0xff]
        %635 = vset.pattern.permute.xlu0 0
        %636 = vperm.xlu0 %635, %v632
        %v637 = vpop.permute.xlu0 %636
        %640 = vset.pattern.permute.xlu0 0
        %641 = vperm.xlu0 %640, %v633
        %v642 = vpop.permute.xlu0 %641
        %v646 = vunpack.c.l.b16 %v628
        %v647 = vunpack.c.l.b16 %v629
        %v648 = vpack.c.b16 %v647, %v646
        %vm649 = vcmask 261120
        %v651 = vsel %vm649, %v648, 0
        %653 = vmatprep.subr.bf16.mxu0 0
        %654 = vmatpush1.bf16.msra.mxu0 %v630
        %655 = vmatprep.subr.bf16.mxu0 0
        %656 = vmatpush1.bf16.msra.mxu0 %v631
        %657 = vmatprep.subr.bf16.mxu0 0
        %658 = vmatpush1.bf16.msra.mxu0 0
        %659 = vmatprep.subr.bf16.mxu0 0
        %660 = vmatpush1.bf16.msra.mxu0 0
        %661 = vmatprep.subr.bf16.mxu0 0
        %662 = vmatpush1.bf16.msra.mxu0 0
        %663 = vmatprep.subr.bf16.mxu0 0
        %664 = vmatpush1.bf16.msra.mxu0 0
        %665 = vmatprep.subr.bf16.mxu0 0
        %666 = vmatpush1.bf16.msra.mxu0 0
        %667 = vmatprep.subr.bf16.mxu0 0
        %668 = vmatpush1.bf16.msra.mxu0 0
        %669 = vmatprep.subr.bf16.mxu0 0
        %670 = vmatpush1.bf16.msra.mxu0 0
        %671 = vmatprep.subr.bf16.mxu0 0
        %672 = vmatpush1.bf16.msra.mxu0 0
        %673 = vmatprep.subr.bf16.mxu0 0
        %674 = vmatpush1.bf16.msra.mxu0 0
        %675 = vmatprep.subr.bf16.mxu0 0
        %676 = vmatpush1.bf16.msra.mxu0 0
        %677 = vmatprep.subr.bf16.mxu0 0
        %678 = vmatpush1.bf16.msra.mxu0 0
        %679 = vmatprep.subr.bf16.mxu0 0
        %680 = vmatpush1.bf16.msra.mxu0 0
        %681 = vmatprep.subr.bf16.mxu0 0
        %682 = vmatpush1.bf16.msra.mxu0 0
        %683 = vmatprep.subr.bf16.mxu0 0
        %684 = vmatpush1.bf16.msra.mxu0 0
        %685 = vmatprep.mubr.bf16.mxu0 0
        %686 = vmatmul.mubr.bf16.gmra.mrb[0].mxu0 %v651
        %v687 = vpop.f32.mrb[0].mxu0
        %v688 = vadd.f32 %v637, %v687
        %v689 = vpop.f32.mrb[0].mxu0
        %v690 = vpop.f32.mrb[0].mxu0
        %v691 = vadd.f32 %v642, %v690
        %v692 = vpop.f32.mrb[0].mxu0
        %693 = vdwg.mxu0
        %v694 = vadd.f32 %v470, %v688
        %v695 = vadd.f32 %v471, %v691
        %v696 = vld [vmem:[%s7] sm:$0x1]
        %v697 = vld [vmem:[%s8] sm:$0x1]
        %698 = vadd.xlane.f32.xlu0 %v694
        %v699 = vpop.xlane.xlu0 %698
        %700 = vadd.xlane.f32.xlu0 %v695
        %v701 = vpop.xlane.xlu0 %700
        %v702 = vmul.f32 %v699, %v478
        %v703 = vmul.f32 %v701, %v478
        %v704 = vsub.f32 %v694, %v702
        %v705 = vsub.f32 %v695, %v703
        %v706 = vmul.f32 %v704, %v704
        %v707 = vmul.f32 %v705, %v705
        %708 = vadd.xlane.f32.xlu0 %v706
        %v709 = vpop.xlane.xlu0 %708
        %710 = vadd.xlane.f32.xlu0 %v707
        %v711 = vpop.xlane.xlu0 %710
        %v712 = vmul.f32 %v709, %v478
        %v713 = vmul.f32 %v711, %v478
        %v714 = vadd.f32 %v712, 1e-05
        %v715 = vadd.f32 %v713, 1e-05
        %v716 = vrsqrt.pop %v714
        %v717 = vrsqrt.pop %v715
        %v718 = vmul.f32 %v704, %v716
        %v719 = vmul.f32 %v705, %v717
        %v721 = vlaneseq
        %v722 = vshrl.u32 %v721, 7
        %v723 = vsub.s32 0, %v722
        %v724 = vrot.slane %v696, %v723
        %v726 = vmul.f32 %v718, %v724
        %v727 = vmul.f32 %v719, %v724
        %v729 = vlaneseq
        %v730 = vshrl.u32 %v729, 7
        %v731 = vsub.s32 0, %v730
        %v732 = vrot.slane %v697, %v731
        %v734 = vadd.f32 %v726, %v732
        %v735 = vadd.f32 %v727, %v732
        %v736 = vpack.c.bf16 %v735, %v734
        %v737 = vld [vmem:[#allocation2] sm:$0xff]
        %v738 = vld [vmem:[#allocation2 + $0x8] sm:$0xff]
        %v739 = vld [vmem:[#allocation2 + $0x10] sm:$0xff]
        %v740 = vld [vmem:[#allocation2 + $0x18] sm:$0xff]
        %v741 = vld [vmem:[#allocation2 + $0x20] sm:$0xff]
        %v742 = vld [vmem:[#allocation2 + $0x28] sm:$0xff]
        %v743 = vld [vmem:[#allocation2 + $0x30] sm:$0xff]
        %v744 = vld [vmem:[#allocation2 + $0x38] sm:$0xff]
        %v745 = vld [vmem:[#allocation2 + $0x40] sm:$0xff]
        %v746 = vld [vmem:[#allocation2 + $0x48] sm:$0xff]
        %v747 = vld [vmem:[#allocation2 + $0x50] sm:$0xff]
        %v748 = vld [vmem:[#allocation2 + $0x58] sm:$0xff]
        %v749 = vld [vmem:[#allocation2 + $0x60] sm:$0xff]
        %v750 = vld [vmem:[#allocation2 + $0x68] sm:$0xff]
        %v751 = vld [vmem:[#allocation2 + $0x70] sm:$0xff]
        %v752 = vld [vmem:[#allocation2 + $0x78] sm:$0xff]
        %v753 = vld [vmem:[%s10] sm:$0x3]
        %v755 = vlaneseq
        %v756 = vshrl.u32 %v755, 7
        %v757 = vsub.s32 0, %v756
        %v758 = vrot.slane %v753, %v757
        %v759 = vlaneseq
        %v760 = vshrl.u32 %v759, 7
        %v761 = vsub.s32 1, %v760
        %v762 = vrot.slane %v753, %v761
        %v781 = vunpack.c.l.b16 %v737
        %v782 = vunpack.c.h.b16 %v737
        %v783 = vunpack.c.l.b16 %v738
        %v784 = vunpack.c.h.b16 %v738
        %v785 = vunpack.c.l.b16 %v739
        %v786 = vunpack.c.h.b16 %v739
        %v787 = vunpack.c.l.b16 %v740
        %v788 = vunpack.c.h.b16 %v740
        %v789 = vunpack.c.l.b16 %v741
        %v790 = vunpack.c.h.b16 %v741
        %v791 = vunpack.c.l.b16 %v742
        %v792 = vunpack.c.h.b16 %v742
        %v793 = vunpack.c.l.b16 %v743
        %v794 = vunpack.c.h.b16 %v743
        %v795 = vunpack.c.l.b16 %v744
        %v796 = vunpack.c.h.b16 %v744
        %v797 = vunpack.c.l.b16 %v745
        %v798 = vunpack.c.h.b16 %v745
        %v799 = vunpack.c.l.b16 %v746
        %v800 = vunpack.c.h.b16 %v746
        %v801 = vunpack.c.l.b16 %v747
        %v802 = vunpack.c.h.b16 %v747
        %v803 = vunpack.c.l.b16 %v748
        %v804 = vunpack.c.h.b16 %v748
        %v805 = vunpack.c.l.b16 %v749
        %v806 = vunpack.c.h.b16 %v749
        %v807 = vunpack.c.l.b16 %v750
        %v808 = vunpack.c.h.b16 %v750
        %v809 = vunpack.c.l.b16 %v751
        %v810 = vunpack.c.h.b16 %v751
        %v811 = vunpack.c.l.b16 %v752
        %v812 = vunpack.c.h.b16 %v752
        %v813 = vpack.c.b16 %v783, %v781
        %v814 = vpack.c.b16 %v784, %v782
        %v815 = vpack.c.b16 %v787, %v785
        %v816 = vpack.c.b16 %v788, %v786
        %v817 = vpack.c.b16 %v791, %v789
        %v818 = vpack.c.b16 %v792, %v790
        %v819 = vpack.c.b16 %v795, %v793
        %v820 = vpack.c.b16 %v796, %v794
        %v821 = vpack.c.b16 %v799, %v797
        %v822 = vpack.c.b16 %v800, %v798
        %v823 = vpack.c.b16 %v803, %v801
        %v824 = vpack.c.b16 %v804, %v802
        %v825 = vpack.c.b16 %v807, %v805
        %v826 = vpack.c.b16 %v808, %v806
        %v827 = vpack.c.b16 %v811, %v809
        %v828 = vpack.c.b16 %v812, %v810
        %845 = vmatprep.subr.bf16.mxu0 %v814
        %846 = vmatpush1.bf16.msra.mxu0 %v813
        %847 = vmatprep.subr.bf16.mxu0 %v816
        %848 = vmatpush1.bf16.msra.mxu0 %v815
        %849 = vmatprep.subr.bf16.mxu0 %v818
        %850 = vmatpush1.bf16.msra.mxu0 %v817
        %851 = vmatprep.subr.bf16.mxu0 %v820
        %852 = vmatpush1.bf16.msra.mxu0 %v819
        %853 = vmatprep.subr.bf16.mxu0 %v822
        %854 = vmatpush1.bf16.msra.mxu0 %v821
        %855 = vmatprep.subr.bf16.mxu0 %v824
        %856 = vmatpush1.bf16.msra.mxu0 %v823
        %857 = vmatprep.subr.bf16.mxu0 %v826
        %858 = vmatpush1.bf16.msra.mxu0 %v825
        %859 = vmatprep.subr.bf16.mxu0 %v828
        %860 = vmatpush1.bf16.msra.mxu0 %v827
        %861 = vmatprep.subr.bf16.mxu0 0
        %862 = vmatpush1.bf16.msra.mxu0 0
        %863 = vmatprep.subr.bf16.mxu0 0
        %864 = vmatpush1.bf16.msra.mxu0 0
        %865 = vmatprep.subr.bf16.mxu0 0
        %866 = vmatpush1.bf16.msra.mxu0 0
        %867 = vmatprep.subr.bf16.mxu0 0
        %868 = vmatpush1.bf16.msra.mxu0 0
        %869 = vmatprep.subr.bf16.mxu0 0
        %870 = vmatpush1.bf16.msra.mxu0 0
        %871 = vmatprep.subr.bf16.mxu0 0
        %872 = vmatpush1.bf16.msra.mxu0 0
        %873 = vmatprep.subr.bf16.mxu0 0
        %874 = vmatpush1.bf16.msra.mxu0 0
        %875 = vmatprep.subr.bf16.mxu0 0
        %876 = vmatpush1.bf16.msra.mxu0 0
        %877 = vmatprep.mubr.bf16.mxu0 0
        %878 = vmatmul.mubr.bf16.gmra.mrb[0].mxu0 %v736
        %v879 = vpop.f32.mrb[0].mxu0
        %v880 = vadd.f32 %v758, %v879
        %v881 = vpop.f32.mrb[0].mxu0
        %v882 = vadd.f32 %v762, %v881
        %v883 = vpop.f32.mrb[0].mxu0
        %v884 = vadd.f32 %v758, %v883
        %v885 = vpop.f32.mrb[0].mxu0
        %v886 = vadd.f32 %v762, %v885
        %887 = vdwg.mxu0
        %v888 = vmul.f32 %v880, 0.5
        %v889 = vmul.f32 %v882, 0.5
        %v890 = vmul.f32 %v884, 0.5
        %v891 = vmul.f32 %v886, 0.5
        %v892 = vmul.f32 %v880, 0.70710677
        %v893 = vmul.f32 %v882, 0.70710677
        %v894 = vmul.f32 %v884, 0.70710677
        %v895 = vmul.f32 %v886, 0.70710677
        %v896 = verf.f32.pop %v892
        %v897 = verf.f32.pop %v893
        %v898 = verf.f32.pop %v894
        %v899 = verf.f32.pop %v895
        %v900 = vadd.f32 %v896, 1.0
        %v901 = vadd.f32 %v897, 1.0
        %v902 = vadd.f32 %v898, 1.0
        %v903 = vadd.f32 %v899, 1.0
        %v904 = vmul.f32 %v888, %v900
        %v905 = vmul.f32 %v889, %v901
        %v906 = vmul.f32 %v890, %v902
        %v907 = vmul.f32 %v891, %v903
        %v908 = vpack.c.bf16 %v906, %v904
        %v909 = vpack.c.bf16 %v907, %v905
        %v910 = vld [vmem:[#allocation5] sm:$0xf]
        %v911 = vld [vmem:[#allocation5 + $0x4] sm:$0xf]
        %v912 = vld [vmem:[#allocation5 + $0x8] sm:$0xf]
        %v913 = vld [vmem:[#allocation5 + $0xc] sm:$0xf]
        %v914 = vld [vmem:[#allocation5 + $0x10] sm:$0xf]
        %v915 = vld [vmem:[#allocation5 + $0x14] sm:$0xf]
        %v916 = vld [vmem:[#allocation5 + $0x18] sm:$0xf]
        %v917 = vld [vmem:[#allocation5 + $0x1c] sm:$0xf]
        %v918 = vld [vmem:[#allocation5 + $0x20] sm:$0xf]
        %v919 = vld [vmem:[#allocation5 + $0x24] sm:$0xf]
        %v920 = vld [vmem:[#allocation5 + $0x28] sm:$0xf]
        %v921 = vld [vmem:[#allocation5 + $0x2c] sm:$0xf]
        %v922 = vld [vmem:[#allocation5 + $0x30] sm:$0xf]
        %v923 = vld [vmem:[#allocation5 + $0x34] sm:$0xf]
        %v924 = vld [vmem:[#allocation5 + $0x38] sm:$0xf]
        %v925 = vld [vmem:[#allocation5 + $0x3c] sm:$0xf]
        %v926 = vld [vmem:[#allocation5 + $0x40] sm:$0xf]
        %v927 = vld [vmem:[#allocation5 + $0x44] sm:$0xf]
        %v928 = vld [vmem:[#allocation5 + $0x48] sm:$0xf]
        %v929 = vld [vmem:[#allocation5 + $0x4c] sm:$0xf]
        %v930 = vld [vmem:[#allocation5 + $0x50] sm:$0xf]
        %v931 = vld [vmem:[#allocation5 + $0x54] sm:$0xf]
        %v932 = vld [vmem:[#allocation5 + $0x58] sm:$0xf]
        %v933 = vld [vmem:[#allocation5 + $0x5c] sm:$0xf]
        %v934 = vld [vmem:[#allocation5 + $0x60] sm:$0xf]
        %v935 = vld [vmem:[#allocation5 + $0x64] sm:$0xf]
        %v936 = vld [vmem:[#allocation5 + $0x68] sm:$0xf]
        %v937 = vld [vmem:[#allocation5 + $0x6c] sm:$0xf]
        %v938 = vld [vmem:[#allocation5 + $0x70] sm:$0xf]
        %v939 = vld [vmem:[#allocation5 + $0x74] sm:$0xf]
        %v940 = vld [vmem:[#allocation5 + $0x78] sm:$0xf]
        %v941 = vld [vmem:[#allocation5 + $0x7c] sm:$0xf]
        %v942 = vld [vmem:[%s12] sm:$0x1]
        %v944 = vlaneseq
        %v945 = vshrl.u32 %v944, 7
        %v946 = vsub.s32 0, %v945
        %v947 = vrot.slane %v942, %v946
        %v981 = vunpack.c.l.b16 %v910
        %v982 = vunpack.c.l.b16 %v911
        %v983 = vunpack.c.l.b16 %v912
        %v984 = vunpack.c.l.b16 %v913
        %v985 = vunpack.c.l.b16 %v914
        %v986 = vunpack.c.l.b16 %v915
        %v987 = vunpack.c.l.b16 %v916
        %v988 = vunpack.c.l.b16 %v917
        %v989 = vunpack.c.l.b16 %v918
        %v990 = vunpack.c.l.b16 %v919
        %v991 = vunpack.c.l.b16 %v920
        %v992 = vunpack.c.l.b16 %v921
        %v993 = vunpack.c.l.b16 %v922
        %v994 = vunpack.c.l.b16 %v923
        %v995 = vunpack.c.l.b16 %v924
        %v996 = vunpack.c.l.b16 %v925
        %v997 = vunpack.c.l.b16 %v926
        %v998 = vunpack.c.l.b16 %v927
        %v999 = vunpack.c.l.b16 %v928
        %v1000 = vunpack.c.l.b16 %v929
        %v1001 = vunpack.c.l.b16 %v930
        %v1002 = vunpack.c.l.b16 %v931
        %v1003 = vunpack.c.l.b16 %v932
        %v1004 = vunpack.c.l.b16 %v933
        %v1005 = vunpack.c.l.b16 %v934
        %v1006 = vunpack.c.l.b16 %v935
        %v1007 = vunpack.c.l.b16 %v936
        %v1008 = vunpack.c.l.b16 %v937
        %v1009 = vunpack.c.l.b16 %v938
        %v1010 = vunpack.c.l.b16 %v939
        %v1011 = vunpack.c.l.b16 %v940
        %v1012 = vunpack.c.l.b16 %v941
        %v1013 = vpack.c.b16 %v982, %v981
        %v1014 = vpack.c.b16 %v984, %v983
        %v1015 = vpack.c.b16 %v986, %v985
        %v1016 = vpack.c.b16 %v988, %v987
        %v1017 = vpack.c.b16 %v990, %v989
        %v1018 = vpack.c.b16 %v992, %v991
        %v1019 = vpack.c.b16 %v994, %v993
        %v1020 = vpack.c.b16 %v996, %v995
        %v1021 = vpack.c.b16 %v998, %v997
        %v1022 = vpack.c.b16 %v1000, %v999
        %v1023 = vpack.c.b16 %v1002, %v1001
        %v1024 = vpack.c.b16 %v1004, %v1003
        %v1025 = vpack.c.b16 %v1006, %v1005
        %v1026 = vpack.c.b16 %v1008, %v1007
        %v1027 = vpack.c.b16 %v1010, %v1009
        %v1028 = vpack.c.b16 %v1012, %v1011
        %1045 = vmatprep.subr.bf16.mxu0 0
        %1046 = vmatpush1.bf16.msra.mxu0 %v1013
        %1047 = vmatprep.subr.bf16.mxu0 0
        %1048 = vmatpush1.bf16.msra.mxu0 %v1014
        %1049 = vmatprep.subr.bf16.mxu0 0
        %1050 = vmatpush1.bf16.msra.mxu0 %v1015
        %1051 = vmatprep.subr.bf16.mxu0 0
        %1052 = vmatpush1.bf16.msra.mxu0 %v1016
        %1053 = vmatprep.subr.bf16.mxu0 0
        %1054 = vmatpush1.bf16.msra.mxu0 %v1017
        %1055 = vmatprep.subr.bf16.mxu0 0
        %1056 = vmatpush1.bf16.msra.mxu0 %v1018
        %1057 = vmatprep.subr.bf16.mxu0 0
        %1058 = vmatpush1.bf16.msra.mxu0 %v1019
        %1059 = vmatprep.subr.bf16.mxu0 0
        %1060 = vmatpush1.bf16.msra.mxu0 %v1020
        %1061 = vmatprep.subr.bf16.mxu0 0
        %1062 = vmatpush1.bf16.msra.mxu0 %v1021
        %1063 = vmatprep.subr.bf16.mxu0 0
        %1064 = vmatpush1.bf16.msra.mxu0 %v1022
        %1065 = vmatprep.subr.bf16.mxu0 0
        %1066 = vmatpush1.bf16.msra.mxu0 %v1023
        %1067 = vmatprep.subr.bf16.mxu0 0
        %1068 = vmatpush1.bf16.msra.mxu0 %v1024
        %1069 = vmatprep.subr.bf16.mxu0 0
        %1070 = vmatpush1.bf16.msra.mxu0 %v1025
        %1071 = vmatprep.subr.bf16.mxu0 0
        %1072 = vmatpush1.bf16.msra.mxu0 %v1026
        %1073 = vmatprep.subr.bf16.mxu0 0
        %1074 = vmatpush1.bf16.msra.mxu0 %v1027
        %1075 = vmatprep.subr.bf16.mxu0 0
        %1076 = vmatpush1.bf16.msra.mxu0 %v1028
        %1077 = vmatprep.mubr.bf16.mxu0 %v909
        %1078 = vmatmul.mubr.bf16.gmra.mrb[0].mxu0 %v908
        %v1079 = vpop.f32.mrb[0].mxu0
        %v1080 = vadd.f32 %v947, %v1079
        %v1081 = vpop.f32.mrb[0].mxu0
        %v1082 = vpop.f32.mrb[0].mxu0
        %v1083 = vadd.f32 %v947, %v1082
        %v1084 = vpop.f32.mrb[0].mxu0
        %1085 = vdwg.mxu0
        %v1086 = vadd.f32 %v694, %v1080
        %v1087 = vadd.f32 %v695, %v1083
        %1088 = vst [vmem:[%s463] sm:$0xff] %v1086
        %1089 = vst [vmem:[%s463 + $0x8] sm:$0xff] %v1087
        %s1090 = sand.u32 %s315, 1
        %s1091 = scalar_lea.sflag [#allocation4], %s1090
        %s1092 = sand.u32 %s315, 1
        %s1093 = smul.addr %s1092, 16
        %s1094 = scalar_lea.vmem [#allocation7], %s1093
        // Predicated region
        $region81: #{tpu_custom_call.1} parent=71 // pred_check
          %p1095 = pneg %p325
        $region82: #{tpu_custom_call.1} parent=71 // pred_check_branch
          %1097 = sbr.rel (%p1095) target = $region84
        $region83: #{tpu_custom_call.1} parent=71 // pred_region
          %s1099 = ssub.s32 256, 256
          %1100 = vsyncadd %s1091, %s1099
          %s1101 = smul.addr %s29, 2
          %s1102 = smul.addr %s1101, 128
          %s1103 = scalar_lea.hbm %s13, %s1102
          %s1104 = sshll.u32 %s1094, 4
          %s1105 = int_to_ptr.vmem [resolvable:$true] %s1104
          %1110 = dma.vmem_to_hbm [thread:$0]  %s1105, 256, %s1103, %s1091, 128, 128, 8
        $region84: #{tpu_custom_call.1} parent=71 // pred_fallthru
          _
      $region72: #{tpu_custom_call.1} parent=5 // pred_fallthru
        _
      %p1111 = scmp.le.s32.totalorder 2, %s24
      // Predicated region
      $region85: #{tpu_custom_call.1} parent=5 // pred_check
        %p1112 = pneg %p1111
      $region86: #{tpu_custom_call.1} parent=5 // pred_check_branch
        %1114 = sbr.rel (%p1112) target = $region88
      $region87: #{tpu_custom_call.1} parent=5 // pred_region
        %s1115 = ssub.s32 %s24, 2
        // Predicated region
        $region89: #{tpu_custom_call.1} parent=87 // pred_check
          %p1116 = pneg %p331
        $region90: #{tpu_custom_call.1} parent=87 // pred_check_branch
          %1118 = sbr.rel (%p1116) target = $region92
        $region91: #{tpu_custom_call.1} parent=87 // pred_region
          %s1119 = sand.u32 %s316, 1
          %s1120 = scalar_lea.sflag [#allocation4], %s1119
          %s1121 = sand.u32 %s316, 1
          %s1122 = smul.addr %s1121, 16
          %s1123 = scalar_lea.vmem [#allocation7], %s1122
          %1124 = dma.done %s1120, 256
        $region92: #{tpu_custom_call.1} parent=87 // pred_fallthru
          _
      $region88: #{tpu_custom_call.1} parent=5 // pred_fallthru
        _
    $region6: #{tpu_custom_call.1} parent=1 // loop_footer
      %s28 = sadd.s32 1, %s24
    $region7: #{tpu_custom_call.1} parent=1 // loop_footer_branch
      %23 = sbr.rel target = $region3
    $region8: #{tpu_custom_call.1} parent=1 // loop_exit
      _
    %1125 = vsyncpa [#allocation3], 1
    %s1126 = scalar_lea.sflag [#allocation3], 1
    %1127 = vsyncpa %s1126, 1
    %1128 = vsyncpa [#allocation6], 1
    %1129 = vsyncpa [#allocation4], 1
    %s1130 = scalar_lea.sflag [#allocation4], 1
    %1131 = vsyncpa %s1130, 1

</llo_original>
